<compile_context>
chip_gen: v5e
topology: v5e:2x2
jax: 0.10.0
libtpu: 0.0.40
codegen_flags: <defaults>
</compile_context>

<pallas_src>
import jax
import jax.numpy as jnp
from jax.experimental import pallas as pl
from jax.experimental.pallas import tpu as pltpu


def _round_up(n, m):
    return ((n + m - 1) // m) * m


def _mlp_kernel(x_ref, w2_ref, b2_ref, w1_ref, b1_ref, w3_ref, b3_ref, o_ref):
    # layer2: (bt, 128) @ (128, 64) + (1, 64) -> relu   (f32 in, f32 acc)
    h = jnp.dot(x_ref[...], w2_ref[...], preferred_element_type=jnp.float32)
    h = jnp.maximum(h + b2_ref[...], 0.0)
    # layer1: (bt, 64) @ (64, 128) + (1, 128) -> relu
    h = jnp.dot(h, w1_ref[...], preferred_element_type=jnp.float32)
    h = jnp.maximum(h + b1_ref[...], 0.0)
    # layer3: (bt, 128) @ (128, nout*2) + (1, nout*2)  (narrow output block)
    o_ref[...] = (jnp.dot(h, w3_ref[...], preferred_element_type=jnp.float32)
                  + b3_ref[...])


def nn_linear_v2_forward(x, params, *, batch_tile=2048):
    """x: (B, 128) float32.  params: dict of transposed f32 weights / biases."""
    B, D_in = x.shape
    assert D_in == 128, "forward as written requires 128-wide input (layer2)"
    nout2 = params["w3"].shape[1]

    w2, b2 = params["w2"], params["b2"]            # (128, 64), (1, 64)
    w1, b1 = params["w1"], params["b1"]            # (64, 128), (1, 128)
    w3, b3 = params["w3"], params["b3"]            # (128, nout2), (1, nout2)

    # Batch tile: single step for small B (cheapest on single-TC v5e/v6e); for
    # large B cap the tile so the grid has >=4 steps (>=2 per TensorCore on
    # 2-TC v7x gives per-core DMA/compute overlap).  16-row aligned.
    bt = min(batch_tile, _round_up(B, 16))
    if B >= 4 * 512:
        bt = min(bt, max(512, _round_up(pl.cdiv(B, 4), 16)))
    n_steps = pl.cdiv(B, bt)   # ragged last block is clipped by Pallas:
                               # garbage rows only produce garbage output rows,
                               # whose out-of-bounds writes are dropped.

    resident = lambda a: pl.BlockSpec(a.shape, lambda i: (0, 0))
    return pl.pallas_call(
        _mlp_kernel,
        out_shape=jax.ShapeDtypeStruct((B, nout2), jnp.float32),
        grid_spec=pltpu.PrefetchScalarGridSpec(
            num_scalar_prefetch=0,
            grid=(n_steps,),
            in_specs=[
                pl.BlockSpec((bt, 128), lambda i: (i, 0)),   # x tile (f32)
                resident(w2), resident(b2),
                resident(w1), resident(b1),
                resident(w3), resident(b3),
            ],
            out_specs=pl.BlockSpec((bt, nout2), lambda i: (i, 0)),
        ),
        compiler_params=pltpu.CompilerParams(
            dimension_semantics=("parallel",)),
    )(x, w2, b2, w1, b1, w3, b3)


def init_params(key, nsipms=64, nout=4):
    """PyTorch-style uniform(+-1/sqrt(fan_in)) init, float32, weights transposed."""
    def linear(k, fan_in, fan_out):
        kw, kb = jax.random.split(k)
        bound = 1.0 / jnp.sqrt(float(fan_in))
        w = jax.random.uniform(kw, (fan_in, fan_out), jnp.float32, -bound, bound)
        b = jax.random.uniform(kb, (1, fan_out), jnp.float32, -bound, bound)
        return w, b

    k1, k2, k3 = jax.random.split(key, 3)
    w1, b1 = linear(k1, nsipms, 128)       # layer1: Linear(nsipms, 128)
    w2, b2 = linear(k2, 128, 64)           # layer2: Linear(128, 64)
    w3, b3 = linear(k3, 128, nout * 2)     # layer3 (see TODO at top)
    return {"w1": w1, "b1": b1, "w2": w2, "b2": b2, "w3": w3, "b3": b3}


def reference_forward(x, p):
    """Pure-JAX f32 reference (HIGHEST-precision dots) mirroring the forward."""
    dot = lambda a, b: jnp.dot(a, b, precision=jax.lax.Precision.HIGHEST)
    h = jnp.maximum(dot(x, p["w2"]) + p["b2"], 0.0)
    h = jnp.maximum(dot(h, p["w1"]) + p["b1"], 0.0)
    return dot(h, p["w3"]) + p["b3"]


if __name__ == "__main__":
    nsipms, nout, batch = 64, 4, 64
    key = jax.random.PRNGKey(0)
    kx, kp = jax.random.split(key)

    params = init_params(kp, nsipms=nsipms, nout=nout)
    x = jax.random.normal(kx, (batch, 128), dtype=jnp.float32)

    out = nn_linear_v2_forward(x, params)
    out = jax.block_until_ready(out)

    ref = reference_forward(x, params)
    assert out.shape == (batch, nout * 2)
    assert jnp.allclose(out, ref, atol=1e-2, rtol=1e-2)

    print("KERNEL_OK")
</pallas_src>

<mosaic_0001>
module attributes {stable_mosaic.version = 11 : i64} {
  func.func @_mlp_kernel(%arg0: i32, %arg1: memref<64x128xf32, #tpu.memory_space<vmem>>, %arg2: memref<128x64xf32, #tpu.memory_space<vmem>>, %arg3: memref<1x64xf32, #tpu.memory_space<vmem>>, %arg4: memref<64x128xf32, #tpu.memory_space<vmem>>, %arg5: memref<1x128xf32, #tpu.memory_space<vmem>>, %arg6: memref<128x8xf32, #tpu.memory_space<vmem>>, %arg7: memref<1x8xf32, #tpu.memory_space<vmem>>, %arg8: memref<64x8xf32, #tpu.memory_space<vmem>>) attributes {dimension_semantics = [#tpu.dimension_semantics<parallel>], iteration_bounds = array<i64: 1>, scalar_prefetch = 0 : i64, scratch_operands = 0 : i64, tpu.core_type = #tpu.core_type<tc>, window_params = [{transform_indices = @transform_0, window_bounds = array<i64: 64, 128>}, {pipeline_mode = #tpu.pipeline_mode<synchronous>, transform_indices = @transform_1, window_bounds = array<i64: 128, 64>}, {pipeline_mode = #tpu.pipeline_mode<synchronous>, transform_indices = @transform_2, window_bounds = array<i64: 1, 64>}, {pipeline_mode = #tpu.pipeline_mode<synchronous>, transform_indices = @transform_3, window_bounds = array<i64: 64, 128>}, {pipeline_mode = #tpu.pipeline_mode<synchronous>, transform_indices = @transform_4, window_bounds = array<i64: 1, 128>}, {pipeline_mode = #tpu.pipeline_mode<synchronous>, transform_indices = @transform_5, window_bounds = array<i64: 128, 8>}, {pipeline_mode = #tpu.pipeline_mode<synchronous>, transform_indices = @transform_6, window_bounds = array<i64: 1, 8>}, {transform_indices = @transform_7, window_bounds = array<i64: 64, 8>}]} {
    %c0 = arith.constant 0 : index
    %c0_0 = arith.constant 0 : index
    %0 = vector.load %arg1[%c0, %c0_0] : memref<64x128xf32, #tpu.memory_space<vmem>>, vector<64x128xf32>
    %c0_1 = arith.constant 0 : index
    %c0_2 = arith.constant 0 : index
    %1 = vector.load %arg2[%c0_1, %c0_2] : memref<128x64xf32, #tpu.memory_space<vmem>>, vector<128x64xf32>
    %cst = arith.constant dense<0.000000e+00> : vector<64x64xf32>
    %2 = tpu.matmul %0, %1, %cst {dimension_numbers = #tpu.dot_dimension_numbers<[1], [0], [0], [1], [0, 0, 1, 1], [], []>} : vector<64x128xf32>, vector<128x64xf32>, vector<64x64xf32> -> vector<64x64xf32>
    %c0_3 = arith.constant 0 : index
    %c0_4 = arith.constant 0 : index
    %3 = vector.load %arg3[%c0_3, %c0_4] : memref<1x64xf32, #tpu.memory_space<vmem>>, vector<1x64xf32>
    %4 = vector.broadcast %3 : vector<1x64xf32> to vector<64x64xf32>
    %5 = arith.addf %2, %4 : vector<64x64xf32>
    %cst_5 = arith.constant 0.000000e+00 : f32
    %6 = vector.broadcast %cst_5 : f32 to vector<64x64xf32>
    %7 = arith.maximumf %5, %6 : vector<64x64xf32>
    %c0_6 = arith.constant 0 : index
    %c0_7 = arith.constant 0 : index
    %8 = vector.load %arg4[%c0_6, %c0_7] : memref<64x128xf32, #tpu.memory_space<vmem>>, vector<64x128xf32>
    %cst_8 = arith.constant dense<0.000000e+00> : vector<64x128xf32>
    %9 = tpu.matmul %7, %8, %cst_8 {dimension_numbers = #tpu.dot_dimension_numbers<[1], [0], [0], [1], [0, 0, 1, 1], [], []>} : vector<64x64xf32>, vector<64x128xf32>, vector<64x128xf32> -> vector<64x128xf32>
    %c0_9 = arith.constant 0 : index
    %c0_10 = arith.constant 0 : index
    %10 = vector.load %arg5[%c0_9, %c0_10] : memref<1x128xf32, #tpu.memory_space<vmem>>, vector<1x128xf32>
    %11 = vector.broadcast %10 : vector<1x128xf32> to vector<64x128xf32>
    %12 = arith.addf %9, %11 : vector<64x128xf32>
    %cst_11 = arith.constant 0.000000e+00 : f32
    %13 = vector.broadcast %cst_11 : f32 to vector<64x128xf32>
    %14 = arith.maximumf %12, %13 : vector<64x128xf32>
    %c0_12 = arith.constant 0 : index
    %c0_13 = arith.constant 0 : index
    %15 = vector.load %arg6[%c0_12, %c0_13] : memref<128x8xf32, #tpu.memory_space<vmem>>, vector<128x8xf32>
    %cst_14 = arith.constant dense<0.000000e+00> : vector<64x8xf32>
    %16 = tpu.matmul %14, %15, %cst_14 {dimension_numbers = #tpu.dot_dimension_numbers<[1], [0], [0], [1], [0, 0, 1, 1], [], []>} : vector<64x128xf32>, vector<128x8xf32>, vector<64x8xf32> -> vector<64x8xf32>
    %c0_15 = arith.constant 0 : index
    %c0_16 = arith.constant 0 : index
    %17 = vector.load %arg7[%c0_15, %c0_16] : memref<1x8xf32, #tpu.memory_space<vmem>>, vector<1x8xf32>
    %18 = vector.broadcast %17 : vector<1x8xf32> to vector<64x8xf32>
    %19 = arith.addf %16, %18 : vector<64x8xf32>
    %c0_17 = arith.constant 0 : index
    %c0_18 = arith.constant 0 : index
    %20 = vector.load %arg8[%c0_17, %c0_18] : memref<64x8xf32, #tpu.memory_space<vmem>>, vector<64x8xf32>
    tpu.vector_store %arg8[%c0_17, %c0_18], %19 {strides = array<i32>} : memref<64x8xf32, #tpu.memory_space<vmem>>, vector<64x8xf32>,
    return
  }
  func.func @transform_0(%arg0: i32) -> (i32, i32) {
    %c0_i32 = arith.constant 0 : i32
    %c0_i32_0 = arith.constant 0 : i32
    return %arg0, %c0_i32 : i32, i32
  }
  func.func @transform_1(%arg0: i32) -> (i32, i32) {
    %c0_i32 = arith.constant 0 : i32
    %c0_i32_0 = arith.constant 0 : i32
    %c0_i32_1 = arith.constant 0 : i32
    return %c0_i32, %c0_i32_0 : i32, i32
  }
  func.func @transform_2(%arg0: i32) -> (i32, i32) {
    %c0_i32 = arith.constant 0 : i32
    %c0_i32_0 = arith.constant 0 : i32
    %c0_i32_1 = arith.constant 0 : i32
    return %c0_i32, %c0_i32_0 : i32, i32
  }
  func.func @transform_3(%arg0: i32) -> (i32, i32) {
    %c0_i32 = arith.constant 0 : i32
    %c0_i32_0 = arith.constant 0 : i32
    %c0_i32_1 = arith.constant 0 : i32
    return %c0_i32, %c0_i32_0 : i32, i32
  }
  func.func @transform_4(%arg0: i32) -> (i32, i32) {
    %c0_i32 = arith.constant 0 : i32
    %c0_i32_0 = arith.constant 0 : i32
    %c0_i32_1 = arith.constant 0 : i32
    return %c0_i32, %c0_i32_0 : i32, i32
  }
  func.func @transform_5(%arg0: i32) -> (i32, i32) {
    %c0_i32 = arith.constant 0 : i32
    %c0_i32_0 = arith.constant 0 : i32
    %c0_i32_1 = arith.constant 0 : i32
    return %c0_i32, %c0_i32_0 : i32, i32
  }
  func.func @transform_6(%arg0: i32) -> (i32, i32) {
    %c0_i32 = arith.constant 0 : i32
    %c0_i32_0 = arith.constant 0 : i32
    %c0_i32_1 = arith.constant 0 : i32
    return %c0_i32, %c0_i32_0 : i32, i32
  }
  func.func @transform_7(%arg0: i32) -> (i32, i32) {
    %c0_i32 = arith.constant 0 : i32
    %c0_i32_0 = arith.constant 0 : i32
    return %arg0, %c0_i32 : i32, i32
  }
}

</mosaic_0001>

<llo_original>
// kernel: tpu_custom_call.1
$region0: #{tpu_custom_call.1}
  #allocation0 [shape = 'u32[]', space=smem, size = 0x4, offset = 0x4, fixed_abs, tag = 'smem constant byte address 0x4 - core index']
  #allocation1 [shape = 'u32[72,128]{1,0:T(1,128)}', space=vmem, size = 0x9000, scoped, tag = 'internal scratch']
  %s0 = inlined_call_operand.vmem [shape: f32[64,128], index: 0, kind: input, shape index: {}]
  %s1 = inlined_call_operand.vmem [shape: f32[128,64], index: 1, kind: input, shape index: {}]
  %s2 = inlined_call_operand.vmem [shape: f32[1,64], index: 2, kind: input, shape index: {}]
  %s3 = inlined_call_operand.vmem [shape: f32[64,128], index: 3, kind: input, shape index: {}]
  %s4 = inlined_call_operand.vmem [shape: f32[1,128], index: 4, kind: input, shape index: {}]
  %s5 = inlined_call_operand.vmem [shape: f32[128,8], index: 5, kind: input, shape index: {}]
  %s6 = inlined_call_operand.vmem [shape: f32[1,8], index: 6, kind: input, shape index: {}]
  %s7 = inlined_call_operand.vmem [shape: f32[64,8], index: 7, kind: output, shape index: {}]
  %s8 = sld [smem:[#allocation0]]
  $region38: #{tpu_custom_call.1} parent=0
    _
  %s10 = ssub.s32 1, %s8
  %s11 = scalar_select 0, %s10, %s8
  // Predicated region
  $region2: #{tpu_custom_call.1} parent=0 // pred_check
    _
  $region3: #{tpu_custom_call.1} parent=0 // pred_check_branch
    %13 = sbr.rel (0) target = $region5
  $region4: #{tpu_custom_call.1} parent=0 // pred_region
    _
  $region5: #{tpu_custom_call.1} parent=0 // pred_fallthru
    _
  // Predicated region
  $region6: #{tpu_custom_call.1} parent=0 // pred_check
    _
  $region7: #{tpu_custom_call.1} parent=0 // pred_check_branch
    %15 = sbr.rel (0) target = $region9
  $region8: #{tpu_custom_call.1} parent=0 // pred_region
    _
  $region9: #{tpu_custom_call.1} parent=0 // pred_fallthru
    _
  // Predicated region
  $region10: #{tpu_custom_call.1} parent=0 // pred_check
    _
  $region11: #{tpu_custom_call.1} parent=0 // pred_check_branch
    %17 = sbr.rel (0) target = $region13
  $region12: #{tpu_custom_call.1} parent=0 // pred_region
    _
  $region13: #{tpu_custom_call.1} parent=0 // pred_fallthru
    _
  // Predicated region
  $region14: #{tpu_custom_call.1} parent=0 // pred_check
    _
  $region15: #{tpu_custom_call.1} parent=0 // pred_check_branch
    %19 = sbr.rel (0) target = $region17
  $region16: #{tpu_custom_call.1} parent=0 // pred_region
    _
  $region17: #{tpu_custom_call.1} parent=0 // pred_fallthru
    _
  // Predicated region
  $region18: #{tpu_custom_call.1} parent=0 // pred_check
    _
  $region19: #{tpu_custom_call.1} parent=0 // pred_check_branch
    %21 = sbr.rel (0) target = $region21
  $region20: #{tpu_custom_call.1} parent=0 // pred_region
    _
  $region21: #{tpu_custom_call.1} parent=0 // pred_fallthru
    _
  // Predicated region
  $region22: #{tpu_custom_call.1} parent=0 // pred_check
    _
  $region23: #{tpu_custom_call.1} parent=0 // pred_check_branch
    %23 = sbr.rel (0) target = $region25
  $region24: #{tpu_custom_call.1} parent=0 // pred_region
    _
  $region25: #{tpu_custom_call.1} parent=0 // pred_fallthru
    _
  // Predicated region
  $region26: #{tpu_custom_call.1} parent=0 // pred_check
    _
  $region27: #{tpu_custom_call.1} parent=0 // pred_check_branch
    %25 = sbr.rel (0) target = $region29
  $region28: #{tpu_custom_call.1} parent=0 // pred_region
    _
  $region29: #{tpu_custom_call.1} parent=0 // pred_fallthru
    _
  %v26 = vld [vmem:[%s0] sm:$0xff]
  %v27 = vld [vmem:[%s0 + $0x8] sm:$0xff]
  %v28 = vld [vmem:[%s0 + $0x10] sm:$0xff]
  %v29 = vld [vmem:[%s0 + $0x18] sm:$0xff]
  %v30 = vld [vmem:[%s0 + $0x20] sm:$0xff]
  %v31 = vld [vmem:[%s0 + $0x28] sm:$0xff]
  %v32 = vld [vmem:[%s0 + $0x30] sm:$0xff]
  %v33 = vld [vmem:[%s0 + $0x38] sm:$0xff]
  %v34 = vld [vmem:[%s1] sm:$0xff]
  %v35 = vld [vmem:[%s1 + $0x8] sm:$0xff]
  %v36 = vld [vmem:[%s1 + $0x10] sm:$0xff]
  %v37 = vld [vmem:[%s1 + $0x18] sm:$0xff]
  %v38 = vld [vmem:[%s1 + $0x20] sm:$0xff]
  %v39 = vld [vmem:[%s1 + $0x28] sm:$0xff]
  %v40 = vld [vmem:[%s1 + $0x30] sm:$0xff]
  %v41 = vld [vmem:[%s1 + $0x38] sm:$0xff]
  %v42 = vld [vmem:[%s1 + $0x40] sm:$0xff]
  %v43 = vld [vmem:[%s1 + $0x48] sm:$0xff]
  %v44 = vld [vmem:[%s1 + $0x50] sm:$0xff]
  %v45 = vld [vmem:[%s1 + $0x58] sm:$0xff]
  %v46 = vld [vmem:[%s1 + $0x60] sm:$0xff]
  %v47 = vld [vmem:[%s1 + $0x68] sm:$0xff]
  %v48 = vld [vmem:[%s1 + $0x70] sm:$0xff]
  %v49 = vld [vmem:[%s1 + $0x78] sm:$0xff]
  %v50 = vld [vmem:[%s2] sm:$0x1]
  %v52 = vperm.slane %v50, 0
  %54 = vmatpush.msra.mxu0 %v49
  %55 = vmatpush.msra.mxu0 %v48
  %56 = vmatpush.msra.mxu0 %v47
  %57 = vmatpush.msra.mxu0 %v46
  %58 = vmatpush.msra.mxu0 %v45
  %59 = vmatpush.msra.mxu0 %v44
  %60 = vmatpush.msra.mxu0 %v43
  %61 = vmatpush.msra.mxu0 %v42
  %62 = vmatpush.msra.mxu0 %v41
  %63 = vmatpush.msra.mxu0 %v40
  %64 = vmatpush.msra.mxu0 %v39
  %65 = vmatpush.msra.mxu0 %v38
  %66 = vmatpush.msra.mxu0 %v37
  %67 = vmatpush.msra.mxu0 %v36
  %68 = vmatpush.msra.mxu0 %v35
  %69 = vmatpush.msra.mxu0 %v34
  %70 = vmatmul.f32.gmra.mxu0 %v26
  %v71 = vpop.f32.mrf.mxu0
  %v72 = vadd.f32 %v52, %v71
  %73 = vmatmul.f32.gmra.mxu0 %v27
  %v74 = vpop.f32.mrf.mxu0
  %v75 = vadd.f32 %v52, %v74
  %76 = vmatmul.f32.gmra.mxu0 %v28
  %v77 = vpop.f32.mrf.mxu0
  %v78 = vadd.f32 %v52, %v77
  %79 = vmatmul.f32.gmra.mxu0 %v29
  %v80 = vpop.f32.mrf.mxu0
  %v81 = vadd.f32 %v52, %v80
  %82 = vmatmul.f32.gmra.mxu0 %v30
  %v83 = vpop.f32.mrf.mxu0
  %v84 = vadd.f32 %v52, %v83
  %85 = vmatmul.f32.gmra.mxu0 %v31
  %v86 = vpop.f32.mrf.mxu0
  %v87 = vadd.f32 %v52, %v86
  %88 = vmatmul.f32.gmra.mxu0 %v32
  %v89 = vpop.f32.mrf.mxu0
  %v90 = vadd.f32 %v52, %v89
  %91 = vmatmul.f32.gmra.mxu0 %v33
  %v92 = vpop.f32.mrf.mxu0
  %v93 = vadd.f32 %v52, %v92
  %94 = vdwg.mxu0
  %v95 = vmax.f32 %v72, 0.0
  %v96 = vmax.f32 %v75, 0.0
  %v97 = vmax.f32 %v78, 0.0
  %v98 = vmax.f32 %v81, 0.0
  %v99 = vmax.f32 %v84, 0.0
  %v100 = vmax.f32 %v87, 0.0
  %v101 = vmax.f32 %v90, 0.0
  %v102 = vmax.f32 %v93, 0.0
  %v103 = vld [vmem:[%s3] sm:$0xff]
  %v104 = vld [vmem:[%s3 + $0x8] sm:$0xff]
  %v105 = vld [vmem:[%s3 + $0x10] sm:$0xff]
  %v106 = vld [vmem:[%s3 + $0x18] sm:$0xff]
  %v107 = vld [vmem:[%s3 + $0x20] sm:$0xff]
  %v108 = vld [vmem:[%s3 + $0x28] sm:$0xff]
  %v109 = vld [vmem:[%s3 + $0x30] sm:$0xff]
  %v110 = vld [vmem:[%s3 + $0x38] sm:$0xff]
  %v111 = vld [vmem:[%s4] sm:$0x1]
  %v113 = vperm.slane %v111, 0
  %vm115 = vcmask 523264
  %v117 = vsel %vm115, %v95, 0
  %v120 = vsel %vm115, %v96, 0
  %v123 = vsel %vm115, %v97, 0
  %v126 = vsel %vm115, %v98, 0
  %v129 = vsel %vm115, %v99, 0
  %v132 = vsel %vm115, %v100, 0
  %v135 = vsel %vm115, %v101, 0
  %v138 = vsel %vm115, %v102, 0
  %140 = vmatpush.msra.mxu0 0.0
  %141 = vmatpush.msra.mxu0 0.0
  %142 = vmatpush.msra.mxu0 0.0
  %143 = vmatpush.msra.mxu0 0.0
  %144 = vmatpush.msra.mxu0 0.0
  %145 = vmatpush.msra.mxu0 0.0
  %146 = vmatpush.msra.mxu0 0.0
  %147 = vmatpush.msra.mxu0 0.0
  %148 = vmatpush.msra.mxu0 %v110
  %149 = vmatpush.msra.mxu0 %v109
  %150 = vmatpush.msra.mxu0 %v108
  %151 = vmatpush.msra.mxu0 %v107
  %152 = vmatpush.msra.mxu0 %v106
  %153 = vmatpush.msra.mxu0 %v105
  %154 = vmatpush.msra.mxu0 %v104
  %155 = vmatpush.msra.mxu0 %v103
  %156 = vmatmul.f32.gmra.mxu0 %v117
  %v157 = vpop.f32.mrf.mxu0
  %v158 = vadd.f32 %v113, %v157
  %159 = vmatmul.f32.gmra.mxu0 %v120
  %v160 = vpop.f32.mrf.mxu0
  %v161 = vadd.f32 %v113, %v160
  %162 = vmatmul.f32.gmra.mxu0 %v123
  %v163 = vpop.f32.mrf.mxu0
  %v164 = vadd.f32 %v113, %v163
  %165 = vmatmul.f32.gmra.mxu0 %v126
  %v166 = vpop.f32.mrf.mxu0
  %v167 = vadd.f32 %v113, %v166
  %168 = vmatmul.f32.gmra.mxu0 %v129
  %v169 = vpop.f32.mrf.mxu0
  %v170 = vadd.f32 %v113, %v169
  %171 = vmatmul.f32.gmra.mxu0 %v132
  %v172 = vpop.f32.mrf.mxu0
  %v173 = vadd.f32 %v113, %v172
  %174 = vmatmul.f32.gmra.mxu0 %v135
  %v175 = vpop.f32.mrf.mxu0
  %v176 = vadd.f32 %v113, %v175
  %177 = vmatmul.f32.gmra.mxu0 %v138
  %v178 = vpop.f32.mrf.mxu0
  %v179 = vadd.f32 %v113, %v178
  %180 = vdwg.mxu0
  %v181 = vmax.f32 %v158, 0.0
  %v182 = vmax.f32 %v161, 0.0
  %v183 = vmax.f32 %v164, 0.0
  %v184 = vmax.f32 %v167, 0.0
  %v185 = vmax.f32 %v170, 0.0
  %v186 = vmax.f32 %v173, 0.0
  %v187 = vmax.f32 %v176, 0.0
  %v188 = vmax.f32 %v179, 0.0
  %v189 = vld [vmem:[%s5] sm:$0xff]
  %v190 = vld [vmem:[%s5 + $0x8] sm:$0xff]
  %v191 = vld [vmem:[%s5 + $0x10] sm:$0xff]
  %v192 = vld [vmem:[%s5 + $0x18] sm:$0xff]
  %v193 = vld [vmem:[%s5 + $0x20] sm:$0xff]
  %v194 = vld [vmem:[%s5 + $0x28] sm:$0xff]
  %v195 = vld [vmem:[%s5 + $0x30] sm:$0xff]
  %v196 = vld [vmem:[%s5 + $0x38] sm:$0xff]
  %v197 = vld [vmem:[%s5 + $0x40] sm:$0xff]
  %v198 = vld [vmem:[%s5 + $0x48] sm:$0xff]
  %v199 = vld [vmem:[%s5 + $0x50] sm:$0xff]
  %v200 = vld [vmem:[%s5 + $0x58] sm:$0xff]
  %v201 = vld [vmem:[%s5 + $0x60] sm:$0xff]
  %v202 = vld [vmem:[%s5 + $0x68] sm:$0xff]
  %v203 = vld [vmem:[%s5 + $0x70] sm:$0xff]
  %v204 = vld [vmem:[%s5 + $0x78] sm:$0xff]
  %v205 = vld [vmem:[%s6] sm:$0x1]
  %v207 = vperm.slane %v205, 0
  %209 = vmatpush.msra.mxu0 %v204
  %210 = vmatpush.msra.mxu0 %v203
  %211 = vmatpush.msra.mxu0 %v202
  %212 = vmatpush.msra.mxu0 %v201
  %213 = vmatpush.msra.mxu0 %v200
  %214 = vmatpush.msra.mxu0 %v199
  %215 = vmatpush.msra.mxu0 %v198
  %216 = vmatpush.msra.mxu0 %v197
  %217 = vmatpush.msra.mxu0 %v196
  %218 = vmatpush.msra.mxu0 %v195
  %219 = vmatpush.msra.mxu0 %v194
  %220 = vmatpush.msra.mxu0 %v193
  %221 = vmatpush.msra.mxu0 %v192
  %222 = vmatpush.msra.mxu0 %v191
  %223 = vmatpush.msra.mxu0 %v190
  %224 = vmatpush.msra.mxu0 %v189
  %225 = vmatmul.f32.gmra.mxu0 %v181
  %v226 = vpop.f32.mrf.mxu0
  %v227 = vadd.f32 %v207, %v226
  %228 = vmatmul.f32.gmra.mxu0 %v182
  %v229 = vpop.f32.mrf.mxu0
  %v230 = vadd.f32 %v207, %v229
  %231 = vmatmul.f32.gmra.mxu0 %v183
  %v232 = vpop.f32.mrf.mxu0
  %v233 = vadd.f32 %v207, %v232
  %234 = vmatmul.f32.gmra.mxu0 %v184
  %v235 = vpop.f32.mrf.mxu0
  %v236 = vadd.f32 %v207, %v235
  %237 = vmatmul.f32.gmra.mxu0 %v185
  %v238 = vpop.f32.mrf.mxu0
  %v239 = vadd.f32 %v207, %v238
  %240 = vmatmul.f32.gmra.mxu0 %v186
  %v241 = vpop.f32.mrf.mxu0
  %v242 = vadd.f32 %v207, %v241
  %243 = vmatmul.f32.gmra.mxu0 %v187
  %v244 = vpop.f32.mrf.mxu0
  %v245 = vadd.f32 %v207, %v244
  %246 = vmatmul.f32.gmra.mxu0 %v188
  %v247 = vpop.f32.mrf.mxu0
  %v248 = vadd.f32 %v207, %v247
  %249 = vdwg.mxu0
  %vm250 = vcmask 64512
  %251 = vst.msk [vmem:[%s7] sm:$0xff] %vm250, %v227
  %252 = vst.msk [vmem:[%s7 + $0x8] sm:$0xff] %vm250, %v230
  %253 = vst.msk [vmem:[%s7 + $0x10] sm:$0xff] %vm250, %v233
  %254 = vst.msk [vmem:[%s7 + $0x18] sm:$0xff] %vm250, %v236
  %255 = vst.msk [vmem:[%s7 + $0x20] sm:$0xff] %vm250, %v239
  %256 = vst.msk [vmem:[%s7 + $0x28] sm:$0xff] %vm250, %v242
  %257 = vst.msk [vmem:[%s7 + $0x30] sm:$0xff] %vm250, %v245
  %258 = vst.msk [vmem:[%s7 + $0x38] sm:$0xff] %vm250, %v248
  // Predicated region
  $region30: #{tpu_custom_call.1} parent=0 // pred_check
    _
  $region31: #{tpu_custom_call.1} parent=0 // pred_check_branch
    %260 = sbr.rel (0) target = $region33
  $region32: #{tpu_custom_call.1} parent=0 // pred_region
    _
  $region33: #{tpu_custom_call.1} parent=0 // pred_fallthru
    _
  // Predicated region
  $region34: #{tpu_custom_call.1} parent=0 // pred_check
    _
  $region35: #{tpu_custom_call.1} parent=0 // pred_check_branch
    %262 = sbr.rel (0) target = $region37
  $region36: #{tpu_custom_call.1} parent=0 // pred_region
    _
  $region37: #{tpu_custom_call.1} parent=0 // pred_fallthru
    _

</llo_original>
